<compile_context>
chip_gen: v6e
topology: v6e:2x2x1
jax: 0.10.0
libtpu: 0.0.40
codegen_flags: <defaults>
</compile_context>

<pallas_src>
import functools

import jax
import jax.numpy as jnp
from jax import lax
from jax.experimental import pallas as pl
from jax.experimental.pallas import tpu as pltpu


# ---------------------------------------------------------------------------
# Generation-aware sizing helpers.
# ---------------------------------------------------------------------------
@functools.lru_cache(maxsize=None)
def _vmem_capacity_bytes():
    """Physical VMEM per core (64 MiB v7x, 128 MiB v5e/v6e); safe fallback."""
    try:
        cap = int(pltpu.get_tpu_info().vmem_capacity_bytes)
        if cap >= 32 * 1024 * 1024:
            return cap
    except Exception:  # noqa: BLE001 - hardware query is best-effort
        pass
    return 64 * 1024 * 1024


def _vmem_limit_bytes():
    return (_vmem_capacity_bytes() * 3) // 4       # headroom for Mosaic scratch


def _pick_tile(n, preferred):
    """Largest MXU/lane-friendly tile that divides n (falls back to n itself)."""
    for t in (preferred, 512, 256, 128, 64, 32, 16, 8):
        if t <= n and n % t == 0:
            return t
    return n


def _flash_tiles(n, num_heads, compute_itemsize):
    """(tq, tkv) for kernel 2, sized to the current chip's VMEM."""
    cap = _vmem_capacity_bytes()
    big = cap >= 100 * 1024 * 1024                 # 128-MiB parts (v5e / v6e)
    tq_pref = 512 if big else 256
    tkv_pref = 512 if big else 256
    if compute_itemsize >= 4:                      # f32 operands: halve footprint
        tq_pref //= 2
        tkv_pref //= 2
    # Keep the f32 (H, tq, tkv) logits intermediate under ~1/8 of VMEM.
    budget = cap // 8
    while num_heads * tq_pref * tkv_pref * 4 > budget and tkv_pref > 128:
        tkv_pref //= 2
    while num_heads * tq_pref * tkv_pref * 4 > budget and tq_pref > 128:
        tq_pref //= 2
    return _pick_tile(n, tq_pref), _pick_tile(n, tkv_pref)


# ---------------------------------------------------------------------------
# Kernel 1: fused QKV projection, emitted directly in (B, H, N, hd) layout.
# ---------------------------------------------------------------------------
def _qkv_head_split_kernel(x_ref, w_ref, q_ref, k_ref, v_ref, *,
                           num_heads, head_dim):
    x = x_ref[0]                                                  # (tn, C)
    # Single full-width matmul against the fused (C, 3C) weight (q-scale folded
    # into the q columns in the wrapper).  f32 accumulate, cast once.
    y = jnp.dot(x, w_ref[...],
                preferred_element_type=jnp.float32).astype(q_ref.dtype)  # (tn, 3C)
    c = num_heads * head_dim
    # Head split via static lane slices + per-head stores: layout work rides
    # the slack of this MXU-bound kernel and the XLA head-split transposes
    # (three full HBM round trips) disappear.
    for h in range(num_heads):
        lo = h * head_dim
        hi = lo + head_dim
        q_ref[0, h] = y[:, lo:hi]
        k_ref[0, h] = y[:, c + lo:c + hi]
        v_ref[0, h] = y[:, 2 * c + lo:2 * c + hi]


def _qkv_head_split(x, w_fused, *, num_heads, head_dim):
    B, N, C = x.shape
    tn = _pick_tile(N, 256)
    qkv_sds = jax.ShapeDtypeStruct((B, num_heads, N, head_dim), x.dtype)
    out_spec = pl.BlockSpec((1, num_heads, tn, head_dim), lambda b, t: (b, 0, t, 0))
    kernel = functools.partial(_qkv_head_split_kernel,
                               num_heads=num_heads, head_dim=head_dim)
    return pl.pallas_call(
        kernel,
        out_shape=(qkv_sds, qkv_sds, qkv_sds),
        grid_spec=pltpu.PrefetchScalarGridSpec(
            num_scalar_prefetch=0,
            grid=(B, N // tn),
            in_specs=[
                pl.BlockSpec((1, tn, C), lambda b, t: (b, t, 0)),
                pl.BlockSpec((C, 3 * C), lambda b, t: (0, 0)),   # fused Wqkv^T
            ],
            out_specs=(out_spec, out_spec, out_spec)),
        compiler_params=pltpu.CompilerParams(
            dimension_semantics=("parallel", "parallel"),
            vmem_limit_bytes=_vmem_limit_bytes()),
    )(x, w_fused)


# ---------------------------------------------------------------------------
# Kernel 2: flash attention (online softmax over KV tiles) + output projection.
# ---------------------------------------------------------------------------
def _flash_attention_proj_kernel(q_ref, k_ref, v_ref, wproj_ref, bias_ref,
                                 o_ref, m_sc, l_sc, acc_sc, o2d_sc, *, n_valid):
    kv = pl.program_id(2)

    @pl.when(kv == 0)
    def _init():
        m_sc[...] = jnp.full(m_sc.shape, -jnp.inf, dtype=m_sc.dtype)
        l_sc[...] = jnp.zeros(l_sc.shape, dtype=l_sc.dtype)
        acc_sc[...] = jnp.zeros(acc_sc.shape, dtype=acc_sc.dtype)

    q = q_ref[0]                                  # (H, tq, hd) -- scale folded into Wq
    k = k_ref[0]                                  # (H, tkv, hd)
    v = v_ref[0]                                  # (H, tkv, hd)

    # All heads in one batched contraction; no explicit k transpose.
    s = jnp.einsum("hqd,hkd->hqk", q, k,
                   preferred_element_type=jnp.float32)        # (H, tq, tkv) f32

    if n_valid is not None:
        # Sequence was padded up to a multiple of 128: mask padded keys.
        tkv = k.shape[1]
        key_idx = kv * tkv + lax.broadcasted_iota(jnp.int32, s.shape, 2)
        s = jnp.where(key_idx < n_valid, s, -jnp.inf)

    m_prev = m_sc[...]
    m_new = jnp.maximum(m_prev, jnp.max(s, axis=-1, keepdims=True))
    alpha = jnp.exp(m_prev - m_new)
    p = jnp.exp(s - m_new)
    l_sc[...] = alpha * l_sc[...] + jnp.sum(p, axis=-1, keepdims=True)
    acc_sc[...] = alpha * acc_sc[...] + jnp.einsum(
        "hqk,hkd->hqd", p.astype(v.dtype), v,
        preferred_element_type=jnp.float32)                   # (H, tq, hd) f32
    m_sc[...] = m_new

    @pl.when(kv == pl.num_programs(2) - 1)
    def _finalize():
        num_heads, _, head_dim = acc_sc.shape
        inv_l = pl.reciprocal(l_sc[...], approx=True)         # EUP, frees VALU
        o = (acc_sc[...] * inv_l).astype(o2d_sc.dtype)        # (H, tq, hd)
        # One-time relayout (H, tq, hd) -> lane-dense (tq, C) in the epilogue,
        # then a single full-depth (tq,C)@(C,C) MXU matmul for the projection.
        for h in range(num_heads):
            o2d_sc[:, h * head_dim:(h + 1) * head_dim] = o[h]
        y = jnp.dot(o2d_sc[...], wproj_ref[...],
                    preferred_element_type=jnp.float32)       # (tq, C) f32
        o_ref[0] = (y + bias_ref[...]).astype(o_ref.dtype)


def _flash_attention_proj(q, k, v, wproj_t, bias2d, *, out_dtype, n_valid):
    B, H, N, hd = q.shape
    C = H * hd
    cdt = q.dtype
    tq, tkv = _flash_tiles(N, H, jnp.dtype(cdt).itemsize)
    kernel = functools.partial(_flash_attention_proj_kernel, n_valid=n_valid)
    return pl.pallas_call(
        kernel,
        out_shape=jax.ShapeDtypeStruct((B, N, C), out_dtype),
        grid_spec=pltpu.PrefetchScalarGridSpec(
            num_scalar_prefetch=0,
            grid=(B, N // tq, N // tkv),
            in_specs=[
                pl.BlockSpec((1, H, tq, hd), lambda b, qi, ki: (b, 0, qi, 0)),
                pl.BlockSpec((1, H, tkv, hd), lambda b, qi, ki: (b, 0, ki, 0)),
                pl.BlockSpec((1, H, tkv, hd), lambda b, qi, ki: (b, 0, ki, 0)),
                pl.BlockSpec((C, C), lambda b, qi, ki: (0, 0)),          # Wproj^T
                pl.BlockSpec((1, C), lambda b, qi, ki: (0, 0)),          # bias (f32)
            ],
            out_specs=pl.BlockSpec((1, tq, C), lambda b, qi, ki: (b, qi, 0)),
            scratch_shapes=[
                pltpu.VMEM((H, tq, 1), jnp.float32),    # running max
                pltpu.VMEM((H, tq, 1), jnp.float32),    # running sum
                pltpu.VMEM((H, tq, hd), jnp.float32),   # output accumulator
                pltpu.VMEM((tq, C), cdt),               # (tq, C) relayout for proj
            ]),
        compiler_params=pltpu.CompilerParams(
            dimension_semantics=("parallel", "parallel", "arbitrary"),
            vmem_limit_bytes=_vmem_limit_bytes()),
    )(q, k, v, wproj_t, bias2d)


# ---------------------------------------------------------------------------
# Public wrapper (matches the PyTorch module forward).
# ---------------------------------------------------------------------------
def attention_forward(x, w_qkv, w_proj, b_proj, *, num_heads,
                      compute_dtype=jnp.bfloat16):
    """x: (B, N, C); w_qkv: (3C, C) torch layout; w_proj: (C, C); b_proj: (C,).

    compute_dtype: dtype for MXU operands and q/k/v intermediates (default
    bfloat16).  Softmax statistics and every accumulation stay in f32.
    """
    B, N, C = x.shape
    assert C % num_heads == 0, "dim should be divisible by num_heads"
    hd = C // num_heads
    out_dtype = x.dtype
    cdt = jnp.dtype(compute_dtype) if compute_dtype is not None else x.dtype

    w_qkv = jnp.asarray(w_qkv)
    w_proj = jnp.asarray(w_proj)
    b_proj = jnp.asarray(b_proj)
    scale = hd ** (-0.5)

    # torch nn.Linear weight is (out_features, in_features): y = x @ W^T.
    # Fuse q/k/v into a single (C, 3C) RHS; fold the q-scale into the q columns.
    wq_t = (w_qkv[:C] * scale).T                              # (C, C)
    wk_t = w_qkv[C:2 * C].T                                   # (C, C)
    wv_t = w_qkv[2 * C:].T                                    # (C, C)
    w_fused = jnp.concatenate([wq_t, wk_t, wv_t], axis=1).astype(cdt)  # (C, 3C)
    wproj_t = w_proj.T.astype(cdt)                            # (C, C)
    bias2d = b_proj.reshape(1, C).astype(jnp.float32)

    # Pad awkward sequence lengths (e.g. ViT's 197) up to a multiple of 128 so
    # tiles stay lane-dense; padded keys are masked inside kernel 2.
    n_real = N
    if N > 128 and N % 128 != 0:
        n_pad = ((N + 127) // 128) * 128
        x = jnp.pad(x, ((0, 0), (0, n_pad - N), (0, 0)))
        N = n_pad
        padded = True
    else:
        padded = False

    xc = x.astype(cdt)

    # Kernel 1: fused QKV projection, q/k/v emitted in (B, H, N, hd) layout
    # (no XLA transposes between the kernels).
    q, k, v = _qkv_head_split(xc, w_fused, num_heads=num_heads, head_dim=hd)

    # Kernel 2: flash attention + output projection + bias.
    y = _flash_attention_proj(q, k, v, wproj_t, bias2d, out_dtype=out_dtype,
                              n_valid=n_real if padded else None)
    if padded:
        y = y[:, :n_real, :]
    return y


def _reference(x, w_qkv, w_proj, b_proj, num_heads):
    """Pure-JAX replica of the PyTorch forward for validation."""
    B, N, C = x.shape
    hd = C // num_heads
    scale = hd ** (-0.5)
    qkv = jnp.einsum("bnc,dc->bnd", x, w_qkv)                 # (B, N, 3C)
    qkv = qkv.reshape(B, N, 3, num_heads, hd).transpose(2, 0, 3, 1, 4)
    q, k, v = qkv[0], qkv[1], qkv[2]                          # (B, H, N, hd)
    attn = jnp.einsum("bhnd,bhmd->bhnm", q * scale, k)
    attn = jax.nn.softmax(attn, axis=-1)
    o = jnp.einsum("bhnm,bhmd->bhnd", attn, v)                # (B, H, N, hd)
    o = o.transpose(0, 2, 1, 3).reshape(B, N, C)
    return jnp.einsum("bnc,dc->bnd", o, w_proj) + b_proj


if __name__ == "__main__":
    B, N, C = 2, 16, 32
    num_heads = 4

    key = jax.random.PRNGKey(0)
    kx, kqkv, kproj, kb = jax.random.split(key, 4)

    x = jax.random.normal(kx, (B, N, C), dtype=jnp.float32)
    # Deterministic synthetic parameters (PyTorch nn.Linear weight layout).
    w_qkv = jax.random.normal(kqkv, (3 * C, C), dtype=jnp.float32) * 0.1  # qkv_bias=False
    w_proj = jax.random.normal(kproj, (C, C), dtype=jnp.float32) * 0.1
    b_proj = jax.random.normal(kb, (C,), dtype=jnp.float32) * 0.1

    ref = _reference(x, w_qkv, w_proj, b_proj, num_heads)

    # f32 compute path (tolerance allows approx-reciprocal softmax normalization).
    out_f32 = attention_forward(x, w_qkv, w_proj, b_proj, num_heads=num_heads,
                                compute_dtype=jnp.float32)
    out_f32 = jax.block_until_ready(out_f32)
    assert out_f32.shape == (B, N, C)
    assert jnp.allclose(out_f32, ref, atol=5e-3, rtol=5e-3), "f32 mismatch vs reference"

    # Default bf16 MXU-operand path (f32 accumulation / softmax stats), loose tolerance.
    out_bf16 = attention_forward(x, w_qkv, w_proj, b_proj, num_heads=num_heads)
    out_bf16 = jax.block_until_ready(out_bf16)
    assert out_bf16.shape == (B, N, C)
    assert jnp.allclose(out_bf16, ref, atol=1e-1, rtol=1e-1), "bf16 mismatch vs reference"

    # Awkward sequence length (> 128, not a multiple of 128): exercises the
    # pad-to-128 + key-masking path.
    N2 = 150
    kx2 = jax.random.split(key, 5)[4]
    x2 = jax.random.normal(kx2, (1, N2, C), dtype=jnp.float32)
    ref2 = _reference(x2, w_qkv, w_proj, b_proj, num_heads)
    out2 = attention_forward(x2, w_qkv, w_proj, b_proj, num_heads=num_heads)
    out2 = jax.block_until_ready(out2)
    assert out2.shape == (1, N2, C)
    assert jnp.allclose(out2, ref2, atol=1e-1, rtol=1e-1), "padded-N mismatch vs reference"

    print("KERNEL_OK")
</pallas_src>

<mosaic_0001>
module attributes {stable_mosaic.version = 11 : i64} {
  func.func @_qkv_head_split_kernel(%arg0: i32, %arg1: i32, %arg2: memref<1x16x32xf32, #tpu.memory_space<vmem>>, %arg3: memref<32x96xf32, #tpu.memory_space<vmem>>, %arg4: memref<1x4x16x8xf32, #tpu.memory_space<vmem>>, %arg5: memref<1x4x16x8xf32, #tpu.memory_space<vmem>>, %arg6: memref<1x4x16x8xf32, #tpu.memory_space<vmem>>) attributes {dimension_semantics = [#tpu.dimension_semantics<parallel>, #tpu.dimension_semantics<parallel>], iteration_bounds = array<i64: 2, 1>, scalar_prefetch = 0 : i64, scratch_operands = 0 : i64, tpu.core_type = #tpu.core_type<tc>, window_params = [{transform_indices = @transform_0, window_bounds = array<i64: 1, 16, 32>}, {pipeline_mode = #tpu.pipeline_mode<synchronous>, transform_indices = @transform_1, window_bounds = array<i64: 32, 96>}, {transform_indices = @transform_2, window_bounds = array<i64: 1, 4, 16, 8>}, {transform_indices = @transform_3, window_bounds = array<i64: 1, 4, 16, 8>}, {transform_indices = @transform_4, window_bounds = array<i64: 1, 4, 16, 8>}]} {
    %c0 = arith.constant 0 : index
    %c0_0 = arith.constant 0 : index
    %c0_1 = arith.constant 0 : index
    %0 = vector.load %arg2[%c0, %c0_0, %c0_1] : memref<1x16x32xf32, #tpu.memory_space<vmem>>, vector<1x16x32xf32>
    %1 = vector.shape_cast %0 : vector<1x16x32xf32> to vector<16x32xf32>
    %c0_2 = arith.constant 0 : index
    %c0_3 = arith.constant 0 : index
    %2 = vector.load %arg3[%c0_2, %c0_3] : memref<32x96xf32, #tpu.memory_space<vmem>>, vector<32x96xf32>
    %cst = arith.constant dense<0.000000e+00> : vector<16x96xf32>
    %3 = tpu.matmul %1, %2, %cst {dimension_numbers = #tpu.dot_dimension_numbers<[1], [0], [0], [1], [0, 0, 1, 1], [], []>} : vector<16x32xf32>, vector<32x96xf32>, vector<16x96xf32> -> vector<16x96xf32>
    %4 = vector.extract_strided_slice %3 {offsets = [0, 0], sizes = [16, 8], strides = [1, 1]} : vector<16x96xf32> to vector<16x8xf32>
    %c0_4 = arith.constant 0 : index
    %c0_5 = arith.constant 0 : index
    %c0_6 = arith.constant 0 : index
    %c0_7 = arith.constant 0 : index
    %5 = vector.load %arg4[%c0_4, %c0_5, %c0_6, %c0_7] : memref<1x4x16x8xf32, #tpu.memory_space<vmem>>, vector<1x1x16x8xf32>
    %6 = vector.shape_cast %5 : vector<1x1x16x8xf32> to vector<16x8xf32>
    %7 = vector.shape_cast %4 : vector<16x8xf32> to vector<1x1x16x8xf32>
    tpu.vector_store %arg4[%c0_4, %c0_5, %c0_6, %c0_7], %7 {strides = array<i32>} : memref<1x4x16x8xf32, #tpu.memory_space<vmem>>, vector<1x1x16x8xf32>,
    %8 = vector.extract_strided_slice %3 {offsets = [0, 32], sizes = [16, 8], strides = [1, 1]} : vector<16x96xf32> to vector<16x8xf32>
    %c0_8 = arith.constant 0 : index
    %c0_9 = arith.constant 0 : index
    %c0_10 = arith.constant 0 : index
    %c0_11 = arith.constant 0 : index
    %9 = vector.load %arg5[%c0_8, %c0_9, %c0_10, %c0_11] : memref<1x4x16x8xf32, #tpu.memory_space<vmem>>, vector<1x1x16x8xf32>
    %10 = vector.shape_cast %9 : vector<1x1x16x8xf32> to vector<16x8xf32>
    %11 = vector.shape_cast %8 : vector<16x8xf32> to vector<1x1x16x8xf32>
    tpu.vector_store %arg5[%c0_8, %c0_9, %c0_10, %c0_11], %11 {strides = array<i32>} : memref<1x4x16x8xf32, #tpu.memory_space<vmem>>, vector<1x1x16x8xf32>,
    %12 = vector.extract_strided_slice %3 {offsets = [0, 64], sizes = [16, 8], strides = [1, 1]} : vector<16x96xf32> to vector<16x8xf32>
    %c0_12 = arith.constant 0 : index
    %c0_13 = arith.constant 0 : index
    %c0_14 = arith.constant 0 : index
    %c0_15 = arith.constant 0 : index
    %13 = vector.load %arg6[%c0_12, %c0_13, %c0_14, %c0_15] : memref<1x4x16x8xf32, #tpu.memory_space<vmem>>, vector<1x1x16x8xf32>
    %14 = vector.shape_cast %13 : vector<1x1x16x8xf32> to vector<16x8xf32>
    %15 = vector.shape_cast %12 : vector<16x8xf32> to vector<1x1x16x8xf32>
    tpu.vector_store %arg6[%c0_12, %c0_13, %c0_14, %c0_15], %15 {strides = array<i32>} : memref<1x4x16x8xf32, #tpu.memory_space<vmem>>, vector<1x1x16x8xf32>,
    %16 = vector.extract_strided_slice %3 {offsets = [0, 8], sizes = [16, 8], strides = [1, 1]} : vector<16x96xf32> to vector<16x8xf32>
    %c0_16 = arith.constant 0 : index
    %c1 = arith.constant 1 : index
    %c0_17 = arith.constant 0 : index
    %c0_18 = arith.constant 0 : index
    %17 = vector.load %arg4[%c0_16, %c1, %c0_17, %c0_18] : memref<1x4x16x8xf32, #tpu.memory_space<vmem>>, vector<1x1x16x8xf32>
    %18 = vector.shape_cast %17 : vector<1x1x16x8xf32> to vector<16x8xf32>
    %19 = vector.shape_cast %16 : vector<16x8xf32> to vector<1x1x16x8xf32>
    tpu.vector_store %arg4[%c0_16, %c1, %c0_17, %c0_18], %19 {strides = array<i32>} : memref<1x4x16x8xf32, #tpu.memory_space<vmem>>, vector<1x1x16x8xf32>,
    %20 = vector.extract_strided_slice %3 {offsets = [0, 40], sizes = [16, 8], strides = [1, 1]} : vector<16x96xf32> to vector<16x8xf32>
    %c0_19 = arith.constant 0 : index
    %c1_20 = arith.constant 1 : index
    %c0_21 = arith.constant 0 : index
    %c0_22 = arith.constant 0 : index
    %21 = vector.load %arg5[%c0_19, %c1_20, %c0_21, %c0_22] : memref<1x4x16x8xf32, #tpu.memory_space<vmem>>, vector<1x1x16x8xf32>
    %22 = vector.shape_cast %21 : vector<1x1x16x8xf32> to vector<16x8xf32>
    %23 = vector.shape_cast %20 : vector<16x8xf32> to vector<1x1x16x8xf32>
    tpu.vector_store %arg5[%c0_19, %c1_20, %c0_21, %c0_22], %23 {strides = array<i32>} : memref<1x4x16x8xf32, #tpu.memory_space<vmem>>, vector<1x1x16x8xf32>,
    %24 = vector.extract_strided_slice %3 {offsets = [0, 72], sizes = [16, 8], strides = [1, 1]} : vector<16x96xf32> to vector<16x8xf32>
    %c0_23 = arith.constant 0 : index
    %c1_24 = arith.constant 1 : index
    %c0_25 = arith.constant 0 : index
    %c0_26 = arith.constant 0 : index
    %25 = vector.load %arg6[%c0_23, %c1_24, %c0_25, %c0_26] : memref<1x4x16x8xf32, #tpu.memory_space<vmem>>, vector<1x1x16x8xf32>
    %26 = vector.shape_cast %25 : vector<1x1x16x8xf32> to vector<16x8xf32>
    %27 = vector.shape_cast %24 : vector<16x8xf32> to vector<1x1x16x8xf32>
    tpu.vector_store %arg6[%c0_23, %c1_24, %c0_25, %c0_26], %27 {strides = array<i32>} : memref<1x4x16x8xf32, #tpu.memory_space<vmem>>, vector<1x1x16x8xf32>,
    %28 = vector.extract_strided_slice %3 {offsets = [0, 16], sizes = [16, 8], strides = [1, 1]} : vector<16x96xf32> to vector<16x8xf32>
    %c0_27 = arith.constant 0 : index
    %c2 = arith.constant 2 : index
    %c0_28 = arith.constant 0 : index
    %c0_29 = arith.constant 0 : index
    %29 = vector.load %arg4[%c0_27, %c2, %c0_28, %c0_29] : memref<1x4x16x8xf32, #tpu.memory_space<vmem>>, vector<1x1x16x8xf32>
    %30 = vector.shape_cast %29 : vector<1x1x16x8xf32> to vector<16x8xf32>
    %31 = vector.shape_cast %28 : vector<16x8xf32> to vector<1x1x16x8xf32>
    tpu.vector_store %arg4[%c0_27, %c2, %c0_28, %c0_29], %31 {strides = array<i32>} : memref<1x4x16x8xf32, #tpu.memory_space<vmem>>, vector<1x1x16x8xf32>,
    %32 = vector.extract_strided_slice %3 {offsets = [0, 48], sizes = [16, 8], strides = [1, 1]} : vector<16x96xf32> to vector<16x8xf32>
    %c0_30 = arith.constant 0 : index
    %c2_31 = arith.constant 2 : index
    %c0_32 = arith.constant 0 : index
    %c0_33 = arith.constant 0 : index
    %33 = vector.load %arg5[%c0_30, %c2_31, %c0_32, %c0_33] : memref<1x4x16x8xf32, #tpu.memory_space<vmem>>, vector<1x1x16x8xf32>
    %34 = vector.shape_cast %33 : vector<1x1x16x8xf32> to vector<16x8xf32>
    %35 = vector.shape_cast %32 : vector<16x8xf32> to vector<1x1x16x8xf32>
    tpu.vector_store %arg5[%c0_30, %c2_31, %c0_32, %c0_33], %35 {strides = array<i32>} : memref<1x4x16x8xf32, #tpu.memory_space<vmem>>, vector<1x1x16x8xf32>,
    %36 = vector.extract_strided_slice %3 {offsets = [0, 80], sizes = [16, 8], strides = [1, 1]} : vector<16x96xf32> to vector<16x8xf32>
    %c0_34 = arith.constant 0 : index
    %c2_35 = arith.constant 2 : index
    %c0_36 = arith.constant 0 : index
    %c0_37 = arith.constant 0 : index
    %37 = vector.load %arg6[%c0_34, %c2_35, %c0_36, %c0_37] : memref<1x4x16x8xf32, #tpu.memory_space<vmem>>, vector<1x1x16x8xf32>
    %38 = vector.shape_cast %37 : vector<1x1x16x8xf32> to vector<16x8xf32>
    %39 = vector.shape_cast %36 : vector<16x8xf32> to vector<1x1x16x8xf32>
    tpu.vector_store %arg6[%c0_34, %c2_35, %c0_36, %c0_37], %39 {strides = array<i32>} : memref<1x4x16x8xf32, #tpu.memory_space<vmem>>, vector<1x1x16x8xf32>,
    %40 = vector.extract_strided_slice %3 {offsets = [0, 24], sizes = [16, 8], strides = [1, 1]} : vector<16x96xf32> to vector<16x8xf32>
    %c0_38 = arith.constant 0 : index
    %c3 = arith.constant 3 : index
    %c0_39 = arith.constant 0 : index
    %c0_40 = arith.constant 0 : index
    %41 = vector.load %arg4[%c0_38, %c3, %c0_39, %c0_40] : memref<1x4x16x8xf32, #tpu.memory_space<vmem>>, vector<1x1x16x8xf32>
    %42 = vector.shape_cast %41 : vector<1x1x16x8xf32> to vector<16x8xf32>
    %43 = vector.shape_cast %40 : vector<16x8xf32> to vector<1x1x16x8xf32>
    tpu.vector_store %arg4[%c0_38, %c3, %c0_39, %c0_40], %43 {strides = array<i32>} : memref<1x4x16x8xf32, #tpu.memory_space<vmem>>, vector<1x1x16x8xf32>,
    %44 = vector.extract_strided_slice %3 {offsets = [0, 56], sizes = [16, 8], strides = [1, 1]} : vector<16x96xf32> to vector<16x8xf32>
    %c0_41 = arith.constant 0 : index
    %c3_42 = arith.constant 3 : index
    %c0_43 = arith.constant 0 : index
    %c0_44 = arith.constant 0 : index
    %45 = vector.load %arg5[%c0_41, %c3_42, %c0_43, %c0_44] : memref<1x4x16x8xf32, #tpu.memory_space<vmem>>, vector<1x1x16x8xf32>
    %46 = vector.shape_cast %45 : vector<1x1x16x8xf32> to vector<16x8xf32>
    %47 = vector.shape_cast %44 : vector<16x8xf32> to vector<1x1x16x8xf32>
    tpu.vector_store %arg5[%c0_41, %c3_42, %c0_43, %c0_44], %47 {strides = array<i32>} : memref<1x4x16x8xf32, #tpu.memory_space<vmem>>, vector<1x1x16x8xf32>,
    %48 = vector.extract_strided_slice %3 {offsets = [0, 88], sizes = [16, 8], strides = [1, 1]} : vector<16x96xf32> to vector<16x8xf32>
    %c0_45 = arith.constant 0 : index
    %c3_46 = arith.constant 3 : index
    %c0_47 = arith.constant 0 : index
    %c0_48 = arith.constant 0 : index
    %49 = vector.load %arg6[%c0_45, %c3_46, %c0_47, %c0_48] : memref<1x4x16x8xf32, #tpu.memory_space<vmem>>, vector<1x1x16x8xf32>
    %50 = vector.shape_cast %49 : vector<1x1x16x8xf32> to vector<16x8xf32>
    %51 = vector.shape_cast %48 : vector<16x8xf32> to vector<1x1x16x8xf32>
    tpu.vector_store %arg6[%c0_45, %c3_46, %c0_47, %c0_48], %51 {strides = array<i32>} : memref<1x4x16x8xf32, #tpu.memory_space<vmem>>, vector<1x1x16x8xf32>,
    return
  }
  func.func @transform_0(%arg0: i32, %arg1: i32) -> (i32, i32, i32) {
    %c0_i32 = arith.constant 0 : i32
    %c0_i32_0 = arith.constant 0 : i32
    return %arg0, %arg1, %c0_i32 : i32, i32, i32
  }
  func.func @transform_1(%arg0: i32, %arg1: i32) -> (i32, i32) {
    %c0_i32 = arith.constant 0 : i32
    %c0_i32_0 = arith.constant 0 : i32
    %c0_i32_1 = arith.constant 0 : i32
    return %c0_i32, %c0_i32_0 : i32, i32
  }
  func.func @transform_2(%arg0: i32, %arg1: i32) -> (i32, i32, i32, i32) {
    %c0_i32 = arith.constant 0 : i32
    %c0_i32_0 = arith.constant 0 : i32
    %c0_i32_1 = arith.constant 0 : i32
    return %arg0, %c0_i32, %arg1, %c0_i32_0 : i32, i32, i32, i32
  }
  func.func @transform_3(%arg0: i32, %arg1: i32) -> (i32, i32, i32, i32) {
    %c0_i32 = arith.constant 0 : i32
    %c0_i32_0 = arith.constant 0 : i32
    %c0_i32_1 = arith.constant 0 : i32
    return %arg0, %c0_i32, %arg1, %c0_i32_0 : i32, i32, i32, i32
  }
  func.func @transform_4(%arg0: i32, %arg1: i32) -> (i32, i32, i32, i32) {
    %c0_i32 = arith.constant 0 : i32
    %c0_i32_0 = arith.constant 0 : i32
    %c0_i32_1 = arith.constant 0 : i32
    return %arg0, %c0_i32, %arg1, %c0_i32_0 : i32, i32, i32, i32
  }
}

</mosaic_0001>

<llo_original>
// kernel: tpu_custom_call.1
$region0: #{tpu_custom_call.1}
  #allocation0 [shape = 'u32[]', space=smem, size = 0x4, offset = 0x4, fixed_abs, tag = 'smem constant byte address 0x4 - core index']
  #allocation1 [shape = 'u32[144,128]{1,0:T(1,128)}', space=vmem, size = 0x12000, scoped, tag = 'internal scratch']
  %s0 = inlined_call_operand.hbm [shape: f32[2,16,32], index: 0, kind: input, shape index: {}]
  %s1 = inlined_call_operand.hbm [shape: f32[32,96], index: 1, kind: input, shape index: {}]
  %s2 = inlined_call_operand.vmem [shape: f32[2,4,16,8], index: 2, kind: output, shape index: {0}]
  %s3 = inlined_call_operand.vmem [shape: f32[2,4,16,8], index: 3, kind: output, shape index: {1}]
  %s4 = inlined_call_operand.vmem [shape: f32[2,4,16,8], index: 4, kind: output, shape index: {2}]
  %5 = xla_tuple %s2, %s3, %s4
  %s6 = sld [smem:[#allocation0]]
  $region65: #{tpu_custom_call.1} parent=0
    _
  %s8 = ssub.s32 1, %s6
  %s9 = scalar_select 0, %s8, %s6
  $region1: #{tpu_custom_call.1} parent=0
    #allocation2 [shape = 'u8[16384]{0}', space=vmem, size = 0x4000, scoped, tag = 'input window, operand 0']
    #allocation3 [shape = 's32[2]{0}', space=sflag, size = 0x8, scoped, tag = 'scoped memory for tpu_custom_call.1']
    #allocation4 [shape = 'u8[16384]{0}', space=vmem, size = 0x4000, scoped, tag = 'input window, operand 1, single buffered']
    #allocation5 [shape = 's32[1]{0}', space=sflag, size = 0x4, scoped, tag = 'scoped memory for tpu_custom_call.1']
    %10 = vsyncpa [#allocation3], 0
    %s11 = scalar_lea.sflag [#allocation3], 1
    %12 = vsyncpa %s11, 0
    %13 = vsyncpa [#allocation5], 0
    loop: start=0, step=1, limit=4
    $region2: #{tpu_custom_call.1} parent=1 // loop_pre_header
      _
    $region3: #{tpu_custom_call.1} parent=1 // loop_header
      %s15 = sphi 0, %s19
      %p16 = scmp.ge.s32.totalorder %s15, 4
      %s22 = sphi 0, %s34
      %s23 = sphi 0, %s30
      %s24 = sphi 0, %s22
      %s25 = sphi 0, %s23
      %s26 = sphi 0, %s24
      %s27 = sphi 0, %s25
      %s39 = sphi 0, %s41
      %s42 = sphi 0, %s39
      %s43 = sphi 0, %s42
      %s59 = sphi 0, %s43
      %s63 = sphi 0, %s63
      %s65 = sphi 0, %s63
      %s66 = sphi 0, %s65
      %s80 = sphi 0, %s66
      %s88 = sphi 0, %s90
      %s91 = sphi 0, %s88
      %s92 = sphi 0, %s91
      %s108 = sphi 0, %s92
      %s116 = sphi 0, %s118
      %s119 = sphi 0, %s116
      %s120 = sphi 0, %s119
      %s136 = sphi 0, %s120
      %s144 = sphi 0, %s146
      %s147 = sphi 0, %s144
      %s148 = sphi 0, %s147
      %s164 = sphi 0, %s148
    $region4: #{tpu_custom_call.1} parent=1 // loop_header_branch
      %18 = sbr.rel (%p16) target = $region8
    $region5: #{tpu_custom_call.1} parent=1 // loop_body
      %s20 = ssub.s32 %s15, 1
      %s21 = ssub.s32 %s15, 2
      %s28 = sadd.s32 1, %s23
      %p29 = scmp.ge.s32.totalorder %s28, 1
      %s30 = scalar_select %p29, 0, %s28
      %s31 = sadd.s32 1, %s22
      %s32 = scalar_select %p29, %s31, %s22
      %p33 = scmp.ge.s32.totalorder %s32, 2
      %s34 = scalar_select %p33, 0, %s32
      %s35 = ssub.s32 %s22, %s34
      %s36 = ssub.s32 %s23, %s30
      %s37 = sor.u32 %s35, %s36
      %p38 = scmp.eq.s32.totalorder %s37, 0
      %s40 = sadd.s32 %s39, 1
      %s41 = scalar_select %p38, %s39, %s40
      %p44 = pneg %p38
      %p45 = scmp.eq.s32.totalorder %s15, 1
      %p46 = por %p44, %p45
      %p47 = scmp.ne.s32.totalorder %s39, %s42
      %p48 = scmp.eq.s32.totalorder %s15, 0
      %p49 = por %p47, %p48
      %p50 = scmp.ne.s32.totalorder %s39, %s42
      %p51 = scmp.eq.s32.totalorder %s20, 1
      %p52 = por %p50, %p51
      %p53 = scmp.ne.s32.totalorder %s42, %s43
      %p54 = scmp.eq.s32.totalorder %s20, 0
      %p55 = por %p53, %p54
      %p56 = scmp.ne.s32.totalorder %s42, %s43
      %p57 = scmp.eq.s32.totalorder %s21, 1
      %p58 = por %p56, %p57
      %p60 = scmp.ne.s32.totalorder %s43, %s59
      %p61 = scmp.eq.s32.totalorder %s21, 0
      %p62 = por %p60, %p61
      %s64 = sadd.s32 %s63, 1
      %p67 = scmp.eq.s32.totalorder %s15, 1
      %p68 = scmp.ne.s32.totalorder %s63, %s65
      %p69 = scmp.eq.s32.totalorder %s15, 0
      %p70 = por %p68, %p69
      %p71 = scmp.ne.s32.totalorder %s63, %s65
      %p72 = scmp.eq.s32.totalorder %s20, 1
      %p73 = por %p71, %p72
      %p74 = scmp.ne.s32.totalorder %s65, %s66
      %p75 = scmp.eq.s32.totalorder %s20, 0
      %p76 = por %p74, %p75
      %p77 = scmp.ne.s32.totalorder %s65, %s66
      %p78 = scmp.eq.s32.totalorder %s21, 1
      %p79 = por %p77, %p78
      %p81 = scmp.ne.s32.totalorder %s66, %s80
      %p82 = scmp.eq.s32.totalorder %s21, 0
      %p83 = por %p81, %p82
      %s84 = ssub.s32 %s22, %s34
      %s85 = ssub.s32 %s23, %s30
      %s86 = sor.u32 %s84, %s85
      %p87 = scmp.eq.s32.totalorder %s86, 0
      %s89 = sadd.s32 %s88, 1
      %s90 = scalar_select %p87, %s88, %s89
      %p93 = pneg %p87
      %p94 = scmp.eq.s32.totalorder %s15, 1
      %p95 = por %p93, %p94
      %p96 = scmp.ne.s32.totalorder %s88, %s91
      %p97 = scmp.eq.s32.totalorder %s15, 0
      %p98 = por %p96, %p97
      %p99 = scmp.ne.s32.totalorder %s88, %s91
      %p100 = scmp.eq.s32.totalorder %s20, 1
      %p101 = por %p99, %p100
      %p102 = scmp.ne.s32.totalorder %s91, %s92
      %p103 = scmp.eq.s32.totalorder %s20, 0
      %p104 = por %p102, %p103
      %p105 = scmp.ne.s32.totalorder %s91, %s92
      %p106 = scmp.eq.s32.totalorder %s21, 1
      %p107 = por %p105, %p106
      %p109 = scmp.ne.s32.totalorder %s92, %s108
      %p110 = scmp.eq.s32.totalorder %s21, 0
      %p111 = por %p109, %p110
      %s112 = ssub.s32 %s22, %s34
      %s113 = ssub.s32 %s23, %s30
      %s114 = sor.u32 %s112, %s113
      %p115 = scmp.eq.s32.totalorder %s114, 0
      %s117 = sadd.s32 %s116, 1
      %s118 = scalar_select %p115, %s116, %s117
      %p121 = pneg %p115
      %p122 = scmp.eq.s32.totalorder %s15, 1
      %p123 = por %p121, %p122
      %p124 = scmp.ne.s32.totalorder %s116, %s119
      %p125 = scmp.eq.s32.totalorder %s15, 0
      %p126 = por %p124, %p125
      %p127 = scmp.ne.s32.totalorder %s116, %s119
      %p128 = scmp.eq.s32.totalorder %s20, 1
      %p129 = por %p127, %p128
      %p130 = scmp.ne.s32.totalorder %s119, %s120
      %p131 = scmp.eq.s32.totalorder %s20, 0
      %p132 = por %p130, %p131
      %p133 = scmp.ne.s32.totalorder %s119, %s120
      %p134 = scmp.eq.s32.totalorder %s21, 1
      %p135 = por %p133, %p134
      %p137 = scmp.ne.s32.totalorder %s120, %s136
      %p138 = scmp.eq.s32.totalorder %s21, 0
      %p139 = por %p137, %p138
      %s140 = ssub.s32 %s22, %s34
      %s141 = ssub.s32 %s23, %s30
      %s142 = sor.u32 %s140, %s141
      %p143 = scmp.eq.s32.totalorder %s142, 0
      %s145 = sadd.s32 %s144, 1
      %s146 = scalar_select %p143, %s144, %s145
      %p149 = pneg %p143
      %p150 = scmp.eq.s32.totalorder %s15, 1
      %p151 = por %p149, %p150
      %p152 = scmp.ne.s32.totalorder %s144, %s147
      %p153 = scmp.eq.s32.totalorder %s15, 0
      %p154 = por %p152, %p153
      %p155 = scmp.ne.s32.totalorder %s144, %s147
      %p156 = scmp.eq.s32.totalorder %s20, 1
      %p157 = por %p155, %p156
      %p158 = scmp.ne.s32.totalorder %s147, %s148
      %p159 = scmp.eq.s32.totalorder %s20, 0
      %p160 = por %p158, %p159
      %p161 = scmp.ne.s32.totalorder %s147, %s148
      %p162 = scmp.eq.s32.totalorder %s21, 1
      %p163 = por %p161, %p162
      %p165 = scmp.ne.s32.totalorder %s148, %s164
      %p166 = scmp.eq.s32.totalorder %s21, 0
      %p167 = por %p165, %p166
      %p168 = scmp.le.s32.totalorder 1, %s15
      %p169 = scmp.lt.s32.totalorder %s15, 3
      %p170 = pnand %p168, %p169
      %p171 = pneg %p170
      // Predicated region
      $region9: #{tpu_custom_call.1} parent=5 // pred_check
        _
      $region10: #{tpu_custom_call.1} parent=5 // pred_check_branch
        %173 = sbr.rel (%p170) target = $region12
      $region11: #{tpu_custom_call.1} parent=5 // pred_region
        %s174 = ssub.s32 %s15, 1
        // Predicated region
        $region13: #{tpu_custom_call.1} parent=11 // pred_check
          %p175 = pneg %p76
        $region14: #{tpu_custom_call.1} parent=11 // pred_check_branch
          %177 = sbr.rel (%p175) target = $region16
        $region15: #{tpu_custom_call.1} parent=11 // pred_region
          %s179 = ssub.s32 512, 512
          %180 = vsyncadd [#allocation5], %s179
          %s181 = sshll.u32 [#allocation4], 4
          %s182 = int_to_ptr.vmem [resolvable:$true] %s181
          %187 = dma.hbm_to_vmem [thread:$0]  %s1, 512, %s182, [#allocation5], 128, 128, 8
        $region16: #{tpu_custom_call.1} parent=11 // pred_fallthru
          _
      $region12: #{tpu_custom_call.1} parent=5 // pred_fallthru
        _
      %p188 = scmp.lt.s32.totalorder %s15, 2
      // Predicated region
      $region17: #{tpu_custom_call.1} parent=5 // pred_check
        %p189 = pneg %p188
      $region18: #{tpu_custom_call.1} parent=5 // pred_check_branch
        %191 = sbr.rel (%p189) target = $region20
      $region19: #{tpu_custom_call.1} parent=5 // pred_region
        // Predicated region
        $region21: #{tpu_custom_call.1} parent=19 // pred_check
          %p192 = pneg %p49
        $region22: #{tpu_custom_call.1} parent=19 // pred_check_branch
          %194 = sbr.rel (%p192) target = $region24
        $region23: #{tpu_custom_call.1} parent=19 // pred_region
          %s195 = sand.u32 %s39, 1
          %s196 = scalar_lea.sflag [#allocation3], %s195
          %s197 = sand.u32 %s39, 1
          %s198 = smul.addr %s197, 16
          %s199 = scalar_lea.vmem [#allocation2], %s198
          %s200 = smul.u32 2, %s23
          %s202 = ssub.s32 256, 256
          %203 = vsyncadd %s196, %s202
          %s204 = smul.addr %s22, 2
          %s205 = sadd.s32 %s200, %s204
          %s206 = smul.addr %s205, 128
          %s207 = scalar_lea.hbm %s0, %s206
          %s208 = sshll.u32 %s199, 4
          %s209 = int_to_ptr.vmem [resolvable:$true] %s208
          %214 = dma.hbm_to_vmem [thread:$0]  %s207, 256, %s209, %s196, 128, 128, 8
        $region24: #{tpu_custom_call.1} parent=19 // pred_fallthru
          _
      $region20: #{tpu_custom_call.1} parent=5 // pred_fallthru
        _
      %p215 = scmp.le.s32.totalorder 1, %s15
      %p216 = scmp.lt.s32.totalorder %s15, 3
      %p217 = pnand %p215, %p216
      %p218 = pneg %p217
      // Predicated region
      $region25: #{tpu_custom_call.1} parent=5 // pred_check
        _
      $region26: #{tpu_custom_call.1} parent=5 // pred_check_branch
        %220 = sbr.rel (%p217) target = $region28
      $region27: #{tpu_custom_call.1} parent=5 // pred_region
        %s221 = ssub.s32 %s15, 1
        %s222 = sand.u32 %s42, 1
        %s223 = scalar_lea.sflag [#allocation3], %s222
        %s224 = sand.u32 %s42, 1
        %s225 = smul.addr %s224, 16
        %s226 = scalar_lea.vmem [#allocation2], %s225
        // Predicated region
        $region29: #{tpu_custom_call.1} parent=27 // pred_check
          %p227 = pneg %p55
        $region30: #{tpu_custom_call.1} parent=27 // pred_check_branch
          %229 = sbr.rel (%p227) target = $region32
        $region31: #{tpu_custom_call.1} parent=27 // pred_region
          %230 = dma.done %s223, 256
        $region32: #{tpu_custom_call.1} parent=27 // pred_fallthru
          _
        // Predicated region
        $region33: #{tpu_custom_call.1} parent=27 // pred_check
          %p231 = pneg %p76
        $region34: #{tpu_custom_call.1} parent=27 // pred_check_branch
          %233 = sbr.rel (%p231) target = $region36
        $region35: #{tpu_custom_call.1} parent=27 // pred_region
          %234 = dma.done [#allocation5], 512
        $region36: #{tpu_custom_call.1} parent=27 // pred_fallthru
          _
        %s235 = sand.u32 %s42, 1
        %s236 = scalar_lea.sflag [#allocation3], %s235
        %s237 = sand.u32 %s42, 1
        %s238 = smul.addr %s237, 16
        %s239 = scalar_lea.vmem [#allocation2], %s238
        %p240 = pneg %p55
        %p241 = pneg %p52
        %p242 = pneg %p76
        %p243 = pneg %p73
        %p244 = pneg %p104
        %p245 = pneg %p101
        %s246 = smul.u32 2, %s25
        %p247 = scmp.lt.s32.totalorder %s24, 1
        %s248 = scalar_select %p247, %s24, 1
        %p249 = scmp.lt.s32.totalorder %s246, 1
        %s250 = scalar_select %p249, %s246, 1
        %s251 = smul.addr %s248, 8
        %s252 = sadd.s32 %s250, %s251
        %s253 = smul.addr %s252, 8
        %s254 = scalar_lea.vmem %s2, %s253
        %p255 = pneg %p132
        %p256 = pneg %p129
        %s257 = smul.u32 2, %s25
        %p258 = scmp.lt.s32.totalorder %s24, 1
        %s259 = scalar_select %p258, %s24, 1
        %p260 = scmp.lt.s32.totalorder %s257, 1
        %s261 = scalar_select %p260, %s257, 1
        %s262 = smul.addr %s259, 8
        %s263 = sadd.s32 %s261, %s262
        %s264 = smul.addr %s263, 8
        %s265 = scalar_lea.vmem %s3, %s264
        %p266 = pneg %p160
        %p267 = pneg %p157
        %s268 = smul.u32 2, %s25
        %p269 = scmp.lt.s32.totalorder %s24, 1
        %s270 = scalar_select %p269, %s24, 1
        %p271 = scmp.lt.s32.totalorder %s268, 1
        %s272 = scalar_select %p271, %s268, 1
        %s273 = smul.addr %s270, 8
        %s274 = sadd.s32 %s272, %s273
        %s275 = smul.addr %s274, 8
        %s276 = scalar_lea.vmem %s4, %s275
        %s277 = smul.u32 2, %s25
        %s278 = smul.u32 2, %s25
        %p279 = scmp.lt.s32.totalorder %s24, 1
        %s280 = scalar_select %p279, %s24, 1
        %p281 = scmp.lt.s32.totalorder %s278, 1
        %s282 = scalar_select %p281, %s278, 1
        %s283 = smul.addr %s280, 8
        %s284 = sadd.s32 %s282, %s283
        %s285 = smul.addr %s284, 8
        %s286 = scalar_lea.vmem %s2, %s285
        %s287 = smul.u32 2, %s25
        %s288 = smul.u32 2, %s25
        %p289 = scmp.lt.s32.totalorder %s24, 1
        %s290 = scalar_select %p289, %s24, 1
        %p291 = scmp.lt.s32.totalorder %s288, 1
        %s292 = scalar_select %p291, %s288, 1
        %s293 = smul.addr %s290, 8
        %s294 = sadd.s32 %s292, %s293
        %s295 = smul.addr %s294, 8
        %s296 = scalar_lea.vmem %s3, %s295
        %s297 = smul.u32 2, %s25
        %s298 = smul.u32 2, %s25
        %p299 = scmp.lt.s32.totalorder %s24, 1
        %s300 = scalar_select %p299, %s24, 1
        %p301 = scmp.lt.s32.totalorder %s298, 1
        %s302 = scalar_select %p301, %s298, 1
        %s303 = smul.addr %s300, 8
        %s304 = sadd.s32 %s302, %s303
        %s305 = smul.addr %s304, 8
        %s306 = scalar_lea.vmem %s4, %s305
        %s307 = smul.u32 2, %s25
        %v308 = vld [vmem:[%s226] sm:$0xff]
        %v309 = vld [vmem:[%s226 + $0x8] sm:$0xff]
        %v310 = vld [vmem:[#allocation4] sm:$0xff]
        %v311 = vld [vmem:[#allocation4 + $0x8] sm:$0xff]
        %v312 = vld [vmem:[#allocation4 + $0x10] sm:$0xff]
        %v313 = vld [vmem:[#allocation4 + $0x18] sm:$0xff]
        %vm314 = vcmask 261120
        %v316 = vsel %vm314, %v308, 0
        %v319 = vsel %vm314, %v309, 0
        %321 = vmatprep.subr.mxu0 0.0
        %322 = vmatpush1.msra.mxu0 0.0
        %323 = vmatprep.subr.mxu0 0.0
        %324 = vmatpush1.msra.mxu0 0.0
        %325 = vmatprep.subr.mxu0 0.0
        %326 = vmatpush1.msra.mxu0 0.0
        %327 = vmatprep.subr.mxu0 0.0
        %328 = vmatpush1.msra.mxu0 0.0
        %329 = vmatprep.subr.mxu0 0.0
        %330 = vmatpush1.msra.mxu0 0.0
        %331 = vmatprep.subr.mxu0 0.0
        %332 = vmatpush1.msra.mxu0 0.0
        %333 = vmatprep.subr.mxu0 0.0
        %334 = vmatpush1.msra.mxu0 0.0
        %335 = vmatprep.subr.mxu0 0.0
        %336 = vmatpush1.msra.mxu0 0.0
        %337 = vmatprep.subr.mxu0 0.0
        %338 = vmatpush1.msra.mxu0 0.0
        %339 = vmatprep.subr.mxu0 0.0
        %340 = vmatpush1.msra.mxu0 0.0
        %341 = vmatprep.subr.mxu0 0.0
        %342 = vmatpush1.msra.mxu0 0.0
        %343 = vmatprep.subr.mxu0 0.0
        %344 = vmatpush1.msra.mxu0 0.0
        %345 = vmatprep.subr.mxu0 0.0
        %346 = vmatpush1.msra.mxu0 %v313
        %347 = vmatprep.subr.mxu0 0.0
        %348 = vmatpush1.msra.mxu0 %v312
        %349 = vmatprep.subr.mxu0 0.0
        %350 = vmatpush1.msra.mxu0 %v311
        %351 = vmatprep.subr.mxu0 0.0
        %352 = vmatpush1.msra.mxu0 %v310
        %353 = vmatprep.subr.mxu0 0.0
        %354 = vmatpush2.msra.mxu0 0.0
        %355 = vmatprep.subr.mxu0 0.0
        %356 = vmatpush2.msra.mxu0 0.0
        %357 = vmatprep.subr.mxu0 0.0
        %358 = vmatpush2.msra.mxu0 0.0
        %359 = vmatprep.subr.mxu0 0.0
        %360 = vmatpush2.msra.mxu0 0.0
        %361 = vmatprep.subr.mxu0 0.0
        %362 = vmatpush2.msra.mxu0 0.0
        %363 = vmatprep.subr.mxu0 0.0
        %364 = vmatpush2.msra.mxu0 0.0
        %365 = vmatprep.subr.mxu0 0.0
        %366 = vmatpush2.msra.mxu0 0.0
        %367 = vmatprep.subr.mxu0 0.0
        %368 = vmatpush2.msra.mxu0 0.0
        %369 = vmatprep.subr.mxu0 0.0
        %370 = vmatpush2.msra.mxu0 0.0
        %371 = vmatprep.subr.mxu0 0.0
        %372 = vmatpush2.msra.mxu0 0.0
        %373 = vmatprep.subr.mxu0 0.0
        %374 = vmatpush2.msra.mxu0 0.0
        %375 = vmatprep.subr.mxu0 0.0
        %376 = vmatpush2.msra.mxu0 0.0
        %377 = vmatprep.subr.mxu0 0.0
        %378 = vmatpush2.msra.mxu0 0.0
        %379 = vmatprep.subr.mxu0 0.0
        %380 = vmatpush2.msra.mxu0 0.0
        %381 = vmatprep.subr.mxu0 0.0
        %382 = vmatpush2.msra.mxu0 0.0
        %383 = vmatprep.subr.mxu0 0.0
        %384 = vmatpush2.msra.mxu0 0.0
        %385 = vmatprep.mubr.f32.mxu0 0.0
        %386 = vmatmul.mubr.f32.gmra.mxu0 %v316
        %v387 = vpop.f32.mrf.mxu0
        %v388 = vadd.f32 0.0, %v387
        %v389 = vpop.f32.mrf.mxu0
        %390 = vmatprep.mubr.f32.mxu0 0.0
        %391 = vmatmul.mubr.f32.gmra.mxu0 %v319
        %v392 = vpop.f32.mrf.mxu0
        %v393 = vadd.f32 0.0, %v392
        %v394 = vpop.f32.mrf.mxu0
        %395 = vdwg.mxu0
        %vm396 = vcmask 64512
        %397 = vst.msk [vmem:[%s286] sm:$0xff] %vm396, %v388
        %398 = vst.msk [vmem:[%s286 + $0x8] sm:$0xff] %vm396, %v393
        %401 = vrot.lane.b32.xlu0 %v388, 96
        %v402 = vpop.permute.xlu0 %401
        %403 = vrot.lane.b32.xlu0 %v393, 96
        %v404 = vpop.permute.xlu0 %403
        %407 = vst.msk [vmem:[%s296] sm:$0xff] %vm396, %v402
        %408 = vst.msk [vmem:[%s296 + $0x8] sm:$0xff] %vm396, %v404
        %409 = vrot.lane.b32.xlu0 %v388, 64
        %v410 = vpop.permute.xlu0 %409
        %411 = vrot.lane.b32.xlu0 %v393, 64
        %v412 = vpop.permute.xlu0 %411
        %415 = vst.msk [vmem:[%s306] sm:$0xff] %vm396, %v410
        %416 = vst.msk [vmem:[%s306 + $0x8] sm:$0xff] %vm396, %v412
        %417 = vrot.lane.b32.xlu0 %v388, 120
        %v418 = vpop.permute.xlu0 %417
        %419 = vrot.lane.b32.xlu0 %v393, 120
        %v420 = vpop.permute.xlu0 %419
        %s423 = scalar_lea.vmem %s286, 16
        %424 = vst.msk [vmem:[%s423] sm:$0xff] %vm396, %v418
        %425 = vst.msk [vmem:[%s423 + $0x8] sm:$0xff] %vm396, %v420
        %426 = vrot.lane.b32.xlu0 %v388, 88
        %v427 = vpop.permute.xlu0 %426
        %428 = vrot.lane.b32.xlu0 %v393, 88
        %v429 = vpop.permute.xlu0 %428
        %s432 = scalar_lea.vmem %s296, 16
        %433 = vst.msk [vmem:[%s432] sm:$0xff] %vm396, %v427
        %434 = vst.msk [vmem:[%s432 + $0x8] sm:$0xff] %vm396, %v429
        %435 = vrot.lane.b32.xlu0 %v388, 56
        %v436 = vpop.permute.xlu0 %435
        %437 = vrot.lane.b32.xlu0 %v393, 56
        %v438 = vpop.permute.xlu0 %437
        %s441 = scalar_lea.vmem %s306, 16
        %442 = vst.msk [vmem:[%s441] sm:$0xff] %vm396, %v436
        %443 = vst.msk [vmem:[%s441 + $0x8] sm:$0xff] %vm396, %v438
        %444 = vrot.lane.b32.xlu0 %v388, 112
        %v445 = vpop.permute.xlu0 %444
        %446 = vrot.lane.b32.xlu0 %v393, 112
        %v447 = vpop.permute.xlu0 %446
        %s450 = scalar_lea.vmem %s286, 32
        %451 = vst.msk [vmem:[%s450] sm:$0xff] %vm396, %v445
        %452 = vst.msk [vmem:[%s450 + $0x8] sm:$0xff] %vm396, %v447
        %453 = vrot.lane.b32.xlu0 %v388, 80
        %v454 = vpop.permute.xlu0 %453
        %455 = vrot.lane.b32.xlu0 %v393, 80
        %v456 = vpop.permute.xlu0 %455
        %s459 = scalar_lea.vmem %s296, 32
        %460 = vst.msk [vmem:[%s459] sm:$0xff] %vm396, %v454
        %461 = vst.msk [vmem:[%s459 + $0x8] sm:$0xff] %vm396, %v456
        %462 = vrot.lane.b32.xlu0 %v388, 48
        %v463 = vpop.permute.xlu0 %462
        %464 = vrot.lane.b32.xlu0 %v393, 48
        %v465 = vpop.permute.xlu0 %464
        %s468 = scalar_lea.vmem %s306, 32
        %469 = vst.msk [vmem:[%s468] sm:$0xff] %vm396, %v463
        %470 = vst.msk [vmem:[%s468 + $0x8] sm:$0xff] %vm396, %v465
        %471 = vrot.lane.b32.xlu0 %v388, 104
        %v472 = vpop.permute.xlu0 %471
        %473 = vrot.lane.b32.xlu0 %v393, 104
        %v474 = vpop.permute.xlu0 %473
        %s477 = scalar_lea.vmem %s286, 48
        %478 = vst.msk [vmem:[%s477] sm:$0xff] %vm396, %v472
        %479 = vst.msk [vmem:[%s477 + $0x8] sm:$0xff] %vm396, %v474
        %480 = vrot.lane.b32.xlu0 %v388, 72
        %v481 = vpop.permute.xlu0 %480
        %482 = vrot.lane.b32.xlu0 %v393, 72
        %v483 = vpop.permute.xlu0 %482
        %s486 = scalar_lea.vmem %s296, 48
        %487 = vst.msk [vmem:[%s486] sm:$0xff] %vm396, %v481
        %488 = vst.msk [vmem:[%s486 + $0x8] sm:$0xff] %vm396, %v483
        %489 = vrot.lane.b32.xlu0 %v388, 40
        %v490 = vpop.permute.xlu0 %489
        %491 = vrot.lane.b32.xlu0 %v393, 40
        %v492 = vpop.permute.xlu0 %491
        %s495 = scalar_lea.vmem %s306, 48
        %496 = vst.msk [vmem:[%s495] sm:$0xff] %vm396, %v490
        %497 = vst.msk [vmem:[%s495 + $0x8] sm:$0xff] %vm396, %v492
        %s498 = smul.u32 2, %s25
        %p499 = scmp.lt.s32.totalorder %s24, 1
        %s500 = scalar_select %p499, %s24, 1
        %p501 = scmp.lt.s32.totalorder %s498, 1
        %s502 = scalar_select %p501, %s498, 1
        %s503 = smul.addr %s500, 8
        %s504 = sadd.s32 %s502, %s503
        %s505 = smul.addr %s504, 8
        %s506 = scalar_lea.vmem %s2, %s505
        %s507 = smul.u32 2, %s25
        %p508 = scmp.lt.s32.totalorder %s24, 1
        %s509 = scalar_select %p508, %s24, 1
        %p510 = scmp.lt.s32.totalorder %s507, 1
        %s511 = scalar_select %p510, %s507, 1
        %s512 = smul.addr %s509, 8
        %s513 = sadd.s32 %s511, %s512
        %s514 = smul.addr %s513, 8
        %s515 = scalar_lea.vmem %s3, %s514
        %s516 = smul.u32 2, %s25
        %p517 = scmp.lt.s32.totalorder %s24, 1
        %s518 = scalar_select %p517, %s24, 1
        %p519 = scmp.lt.s32.totalorder %s516, 1
        %s520 = scalar_select %p519, %s516, 1
        %s521 = smul.addr %s518, 8
        %s522 = sadd.s32 %s520, %s521
        %s523 = smul.addr %s522, 8
        %s524 = scalar_lea.vmem %s4, %s523
        // Predicated region
        $region37: #{tpu_custom_call.1} parent=27 // pred_check
          %p525 = pneg %p101
        $region38: #{tpu_custom_call.1} parent=27 // pred_check_branch
          %527 = sbr.rel (%p525) target = $region40
        $region39: #{tpu_custom_call.1} parent=27 // pred_region
          %s528 = smul.u32 2, %s25
        $region40: #{tpu_custom_call.1} parent=27 // pred_fallthru
          _
        // Predicated region
        $region41: #{tpu_custom_call.1} parent=27 // pred_check
          %p529 = pneg %p129
        $region42: #{tpu_custom_call.1} parent=27 // pred_check_branch
          %531 = sbr.rel (%p529) target = $region44
        $region43: #{tpu_custom_call.1} parent=27 // pred_region
          %s532 = smul.u32 2, %s25
        $region44: #{tpu_custom_call.1} parent=27 // pred_fallthru
          _
        // Predicated region
        $region45: #{tpu_custom_call.1} parent=27 // pred_check
          %p533 = pneg %p157
        $region46: #{tpu_custom_call.1} parent=27 // pred_check_branch
          %535 = sbr.rel (%p533) target = $region48
        $region47: #{tpu_custom_call.1} parent=27 // pred_region
          %s536 = smul.u32 2, %s25
        $region48: #{tpu_custom_call.1} parent=27 // pred_fallthru
          _
      $region28: #{tpu_custom_call.1} parent=5 // pred_fallthru
        _
      %p537 = scmp.le.s32.totalorder 2, %s15
      // Predicated region
      $region49: #{tpu_custom_call.1} parent=5 // pred_check
        %p538 = pneg %p537
      $region50: #{tpu_custom_call.1} parent=5 // pred_check_branch
        %540 = sbr.rel (%p538) target = $region52
      $region51: #{tpu_custom_call.1} parent=5 // pred_region
        %s541 = ssub.s32 %s15, 2
        // Predicated region
        $region53: #{tpu_custom_call.1} parent=51 // pred_check
          %p542 = pneg %p107
        $region54: #{tpu_custom_call.1} parent=51 // pred_check_branch
          %544 = sbr.rel (%p542) target = $region56
        $region55: #{tpu_custom_call.1} parent=51 // pred_region
          %s545 = smul.u32 2, %s27
          %p546 = scmp.lt.s32.totalorder %s26, 1
          %s547 = scalar_select %p546, %s26, 1
          %p548 = scmp.lt.s32.totalorder %s545, 1
          %s549 = scalar_select %p548, %s545, 1
          %s550 = smul.addr %s547, 8
          %s551 = sadd.s32 %s549, %s550
          %s552 = smul.addr %s551, 8
          %s553 = scalar_lea.vmem %s2, %s552
        $region56: #{tpu_custom_call.1} parent=51 // pred_fallthru
          _
        // Predicated region
        $region57: #{tpu_custom_call.1} parent=51 // pred_check
          %p554 = pneg %p135
        $region58: #{tpu_custom_call.1} parent=51 // pred_check_branch
          %556 = sbr.rel (%p554) target = $region60
        $region59: #{tpu_custom_call.1} parent=51 // pred_region
          %s557 = smul.u32 2, %s27
          %p558 = scmp.lt.s32.totalorder %s26, 1
          %s559 = scalar_select %p558, %s26, 1
          %p560 = scmp.lt.s32.totalorder %s557, 1
          %s561 = scalar_select %p560, %s557, 1
          %s562 = smul.addr %s559, 8
          %s563 = sadd.s32 %s561, %s562
          %s564 = smul.addr %s563, 8
          %s565 = scalar_lea.vmem %s3, %s564
        $region60: #{tpu_custom_call.1} parent=51 // pred_fallthru
          _
        // Predicated region
        $region61: #{tpu_custom_call.1} parent=51 // pred_check
          %p566 = pneg %p163
        $region62: #{tpu_custom_call.1} parent=51 // pred_check_branch
          %568 = sbr.rel (%p566) target = $region64
        $region63: #{tpu_custom_call.1} parent=51 // pred_region
          %s569 = smul.u32 2, %s27
          %p570 = scmp.lt.s32.totalorder %s26, 1
          %s571 = scalar_select %p570, %s26, 1
          %p572 = scmp.lt.s32.totalorder %s569, 1
          %s573 = scalar_select %p572, %s569, 1
          %s574 = smul.addr %s571, 8
          %s575 = sadd.s32 %s573, %s574
          %s576 = smul.addr %s575, 8
          %s577 = scalar_lea.vmem %s4, %s576
        $region64: #{tpu_custom_call.1} parent=51 // pred_fallthru
          _
      $region52: #{tpu_custom_call.1} parent=5 // pred_fallthru
        _
    $region6: #{tpu_custom_call.1} parent=1 // loop_footer
      %s19 = sadd.s32 1, %s15
    $region7: #{tpu_custom_call.1} parent=1 // loop_footer_branch
      %14 = sbr.rel target = $region3
    $region8: #{tpu_custom_call.1} parent=1 // loop_exit
      _
    %578 = vsyncpa [#allocation3], 1
    %s579 = scalar_lea.sflag [#allocation3], 1
    %580 = vsyncpa %s579, 1
    %581 = vsyncpa [#allocation5], 1

</llo_original>
